<compile_context>
chip_gen: v7x
topology: tpu7x:2x2x1
jax: 0.10.0
libtpu: 0.0.40
codegen_flags: <defaults>
</compile_context>

<pallas_src>
import functools

import jax
import jax.numpy as jnp
import numpy as np
from jax.experimental import pallas as pl
from jax.experimental.pallas import tpu as pltpu

MAX_DEGREE = 4       # MFConv(max_degree=4) -> degrees 0..4, 5 weight pairs
_TILE_N = 512        # adj row tile (nodes per step)
_TILE_K_MAX = 2048   # adj column tile / x row tile upper bound


def _round_up(v, m):
    return (v + m - 1) // m * m


def _detect_v7x():
    """True on 2-TensorCore / 64-MiB-VMEM parts; conservative fallback is False."""
    try:
        return "v7" in jax.devices()[0].device_kind.lower()
    except Exception:
        return False


_IS_V7X = _detect_v7x()
_N_PAR = 2 if _IS_V7X else 1          # parallel grid split only where there are 2 TCs


def _spec(shape, index_map, buffers=None):
    """BlockSpec with optional deeper pipelining; falls back if unsupported."""
    if buffers is not None and buffers != 2:
        try:
            return pl.BlockSpec(shape, index_map, pipeline_mode=pl.Buffered(buffers))
        except Exception:
            pass
    return pl.BlockSpec(shape, index_map)


def _fpnn_kernel(adj_ref, xk_ref, xrow_ref, pool_ref, wl_ref, wr_ref, o_ref,
                 h_acc, *, n_deg, cin, cout, stride):
    """One (core, node-tile, adj-column-tile) grid step.

    adj_ref:  [tN, tK]          bf16  adj[i, j] = #edges j -> i (rows = this node tile)
    xk_ref:   [tK, Cin+1]       bf16  node features + trailing all-ones column
    xrow_ref: [tN, Cin]         f32   this node tile's features (root term, full precision)
    pool_ref: [G, tN]           f32   pool[g, i] = 1 iff node i of this tile is in graph g
    wl_ref:   [Cin, D1*stride]  f32   degree-concatenated neighbor weights (lane-padded)
    wr_ref:   [Cin, D1*stride]  f32   degree-concatenated root weights (lane-padded)
    o_ref:    [1, G, Cout]      f32   pooled partial sum for this core
    h_acc:    [tN, Cin+1]       f32   VMEM scratch: neighbor-sum accumulator over column tiles
    """
    j = pl.program_id(1)
    k = pl.program_id(2)

    @pl.when(k == 0)
    def _():
        h_acc[...] = jnp.zeros_like(h_acc)

    # Dominant op: native bf16 MXU matmul, f32 accumulation (no f32 adj copy).
    # Column `cin` of xk is all-ones, so h_acc[:, cin] accumulates the in-degree.
    h_acc[...] += jnp.dot(adj_ref[...], xk_ref[...],
                          preferred_element_type=jnp.float32)

    @pl.when(k == pl.num_programs(2) - 1)
    def _():
        h = h_acc[...]                                            # [tN, Cin+1]
        hx = h[:, :cin]                                           # neighbor feature sum
        deg = jnp.minimum(h[:, cin:cin + 1],
                          float(n_deg - 1)).astype(jnp.int32)     # clamped in-degree [tN,1]

        # All degree branches in one wide MXU pass; per-degree stride is a lane multiple
        # so each slice below is vreg-aligned.
        t = (jnp.dot(hx, wl_ref[...], preferred_element_type=jnp.float32)
             + jnp.dot(xrow_ref[...], wr_ref[...],
                       preferred_element_type=jnp.float32))       # [tN, n_deg*stride]

        out = t[:, 0:cout]
        for d in range(1, n_deg):
            out = jnp.where(deg == d, t[:, d * stride:d * stride + cout], out)

        # ReLU -> numerically-stable softmax over channels; approx reciprocal on the EUP.
        out = jnp.maximum(out, 0.0)
        out = out - jnp.max(out, axis=-1, keepdims=True)
        e = jnp.exp(out)
        sm = e * pl.reciprocal(jnp.sum(e, axis=-1, keepdims=True), approx=True)

        # global_add_pool restricted to this tile (padded nodes have zero pool columns).
        pooled = jnp.dot(pool_ref[...], sm, preferred_element_type=jnp.float32)

        @pl.when(j == 0)
        def _():
            o_ref[...] = jnp.zeros_like(o_ref)

        o_ref[...] += pooled[None, :, :]


@functools.partial(jax.jit, static_argnames=("num_graphs",))
def fpnn_v3_forward(x, edge_index, batch, w_l, w_r, *, num_graphs):
    """Dense-graph FPNN_v3 forward. Returns [num_graphs, out_channels]."""
    n, cin = x.shape
    n_deg, _, cout = w_l.shape
    stride = _round_up(cout, 128)       # lane-aligned per-degree stride
    wide = n_deg * stride

    # ---- tiling: row tiles (tn), adjacency-column tiles (tk), optional 2-TC split ----
    if _round_up(n, 8) <= _TILE_N:
        tn = _round_up(n, 8)            # single tile both ways (full-dim blocks)
        n_par = 1
        n_pad = tn
        tk = n_pad
    else:
        tn = _TILE_N
        n_par = _N_PAR                  # guaranteed-even split on v7x via the padding below
        n_pad = _round_up(n, tn * n_par)
        if n_pad <= _TILE_K_MAX:
            tk = n_pad
        else:
            tk = tn
            for cand in (_TILE_K_MAX, _TILE_K_MAX // 2, _TILE_K_MAX // 4):
                if n_pad % cand == 0:
                    tk = cand
                    break
    row_tiles = n_pad // tn
    tpp = row_tiles // n_par            # row tiles per core
    k_tiles = n_pad // tk

    src, tgt = edge_index[0], edge_index[1]

    # adj[i, j] = #edges j -> i, built directly at padded shape in bf16 (exact while
    # per-(i, j) edge multiplicity <= 256).
    adj = jnp.zeros((n_pad, n_pad), jnp.bfloat16).at[tgt, src].add(1.0)
    # Root-term features at full f32 precision (padded rows zero).
    x_pad = jnp.zeros((n_pad, cin), jnp.float32).at[:n, :].set(x.astype(jnp.float32))
    # bf16 features + trailing ones column (degree falls out of the adj matmul for free).
    xk = jnp.zeros((n_pad, cin + 1), jnp.bfloat16)
    xk = xk.at[:n, :cin].set(x.astype(jnp.bfloat16))
    xk = xk.at[:n, cin].set(1.0)
    # pool[g, i] = 1 iff node i belongs to graph g (f32: its bytes are negligible vs adj).
    pool = jnp.zeros((num_graphs, n_pad), jnp.float32).at[batch, jnp.arange(n)].set(1.0)

    # Fused per-degree weights [D+1, Cin, Cout] -> [Cin, (D+1)*stride], zero-padded so
    # every degree slice starts on a 128-lane boundary.
    wl_pad = jnp.pad(w_l.astype(jnp.float32), ((0, 0), (0, 0), (0, stride - cout)))
    wr_pad = jnp.pad(w_r.astype(jnp.float32), ((0, 0), (0, 0), (0, stride - cout)))
    wl_wide = jnp.transpose(wl_pad, (1, 0, 2)).reshape(cin, wide)
    wr_wide = jnp.transpose(wr_pad, (1, 0, 2)).reshape(cin, wide)

    # Deeper adj buffering only on 128-MiB-VMEM parts and only when there are enough steps.
    adj_buffers = 3 if ((not _IS_V7X) and tpp * k_tiles >= 3) else None
    n_adj_buf = adj_buffers if adj_buffers else 2

    # Per-step working set (bounded, independent of N); cap at 48 MiB on v7x.
    vmem_need = (n_adj_buf * tn * tk * 2            # adj tiles (bf16)
                 + 2 * tk * (cin + 1) * 2           # xk tiles (bf16)
                 + 2 * tn * cin * 4                 # xrow tiles
                 + 2 * num_graphs * tn * 4          # pool tiles
                 + 4 * cin * wide * 4               # wl/wr (double-buffered residents)
                 + 2 * num_graphs * cout * 4        # pooled output block
                 + tn * (cin + 1) * 4               # h accumulator scratch
                 + 3 * tn * wide * 4                # in-kernel f32 temporaries
                 + (2 << 20))                       # headroom
    vmem_cap = (48 << 20) if _IS_V7X else (96 << 20)
    vmem_limit = int(min(vmem_cap, max(32 << 20, 2 * vmem_need)))

    out = pl.pallas_call(
        functools.partial(_fpnn_kernel, n_deg=n_deg, cin=cin, cout=cout, stride=stride),
        out_shape=jax.ShapeDtypeStruct((n_par, num_graphs, cout), jnp.float32),
        grid=(n_par, tpp, k_tiles),
        in_specs=[
            _spec((tn, tk), lambda i, j, k: (i * tpp + j, k), adj_buffers),   # adj tile
            pl.BlockSpec((tk, cin + 1), lambda i, j, k: (k, 0)),              # x k-tile (+ones)
            pl.BlockSpec((tn, cin), lambda i, j, k: (i * tpp + j, 0)),        # x row tile (root)
            pl.BlockSpec((num_graphs, tn), lambda i, j, k: (0, i * tpp + j)), # pool col tile
            pl.BlockSpec((cin, wide), lambda i, j, k: (0, 0)),                # W_l wide (resident)
            pl.BlockSpec((cin, wide), lambda i, j, k: (0, 0)),                # W_r wide (resident)
        ],
        out_specs=pl.BlockSpec((1, num_graphs, cout), lambda i, j, k: (i, 0, 0)),
        scratch_shapes=[pltpu.VMEM((tn, cin + 1), jnp.float32)],
        compiler_params=pltpu.CompilerParams(
            dimension_semantics=("parallel", "arbitrary", "arbitrary"),
            vmem_limit_bytes=vmem_limit),
    )(adj, xk, x_pad, pool, wl_wide, wr_wide)

    return out.sum(axis=0)   # combine per-core partial pooled sums


def fpnn_v3_reference(x, edge_index, batch, w_l, w_r, *, num_graphs):
    """Pure-JAX f32 reference mirroring torch_geometric MFConv + relu + softmax + add-pool."""
    n = x.shape[0]
    src, tgt = edge_index[0], edge_index[1]
    h = jnp.zeros_like(x).at[tgt].add(x[src])
    deg = jnp.clip(jnp.zeros((n,), jnp.int32).at[tgt].add(1), 0, MAX_DEGREE)
    out = (jnp.einsum('ni,nio->no', h, w_l[deg])
           + jnp.einsum('ni,nio->no', x, w_r[deg]))
    out = jax.nn.relu(out)
    out = jax.nn.softmax(out, axis=1)
    return jnp.zeros((num_graphs, out.shape[1]), out.dtype).at[batch].add(out)


if __name__ == "__main__":
    # ---- small smoke test: 2 graphs x 4 nodes, in_channels=4, out_channels=64 ----
    N, C_IN, C_OUT, G = 8, 4, 64, 2

    key = jax.random.PRNGKey(0)
    k_x, k_wl, k_wr, k_x2, k_s2, k_t2 = jax.random.split(key, 6)

    x = jax.random.normal(k_x, (N, C_IN), dtype=jnp.float32)
    src = jnp.array([0, 1, 1, 2, 2, 3, 0, 3, 4, 5, 5, 6, 6, 7], dtype=jnp.int32)
    tgt = jnp.array([1, 0, 2, 1, 3, 2, 3, 0, 5, 4, 6, 5, 7, 6], dtype=jnp.int32)
    edge_index = jnp.stack([src, tgt], axis=0)                     # [2, E]
    batch = jnp.array([0, 0, 0, 0, 1, 1, 1, 1], dtype=jnp.int32)   # [N]

    bound = 1.0 / np.sqrt(C_IN)
    w_l = jax.random.uniform(k_wl, (MAX_DEGREE + 1, C_IN, C_OUT),
                             minval=-bound, maxval=bound, dtype=jnp.float32)
    w_r = jax.random.uniform(k_wr, (MAX_DEGREE + 1, C_IN, C_OUT),
                             minval=-bound, maxval=bound, dtype=jnp.float32)

    out = jax.block_until_ready(
        fpnn_v3_forward(x, edge_index, batch, w_l, w_r, num_graphs=G))
    ref = fpnn_v3_reference(x, edge_index, batch, w_l, w_r, num_graphs=G)
    # Tolerances account for the bf16 neighbor-aggregation inputs (accumulation is f32)
    # and the EUP approximate reciprocal in the softmax normalization.
    np.testing.assert_allclose(np.asarray(out), np.asarray(ref), rtol=2e-2, atol=2e-3)

    # ---- larger test exercising the tiled / padded / multi-tile accumulate path ----
    N2, E2, G2 = 2000, 6000, 4
    x2 = jax.random.normal(k_x2, (N2, C_IN), dtype=jnp.float32)
    src2 = jax.random.randint(k_s2, (E2,), 0, N2, dtype=jnp.int32)
    tgt2 = jax.random.randint(k_t2, (E2,), 0, N2, dtype=jnp.int32)
    edge_index2 = jnp.stack([src2, tgt2], axis=0)
    batch2 = (jnp.arange(N2, dtype=jnp.int32) * G2) // N2          # 4 contiguous graphs

    out2 = jax.block_until_ready(
        fpnn_v3_forward(x2, edge_index2, batch2, w_l, w_r, num_graphs=G2))
    ref2 = fpnn_v3_reference(x2, edge_index2, batch2, w_l, w_r, num_graphs=G2)
    np.testing.assert_allclose(np.asarray(out2), np.asarray(ref2), rtol=2e-2, atol=1e-2)

    print("KERNEL_OK")
</pallas_src>

<mosaic_0001>
module attributes {stable_mosaic.version = 11 : i64} {
  func.func @_fpnn_kernel(%arg0: i32, %arg1: i32, %arg2: i32, %arg3: memref<8x8xbf16, #tpu.memory_space<vmem>>, %arg4: memref<8x5xbf16, #tpu.memory_space<vmem>>, %arg5: memref<8x4xf32, #tpu.memory_space<vmem>>, %arg6: memref<2x8xf32, #tpu.memory_space<vmem>>, %arg7: memref<4x640xf32, #tpu.memory_space<vmem>>, %arg8: memref<4x640xf32, #tpu.memory_space<vmem>>, %arg9: memref<1x2x64xf32, #tpu.memory_space<vmem>>, %arg10: memref<8x5xf32, #tpu.memory_space<vmem>>) attributes {dimension_semantics = [#tpu.dimension_semantics<parallel>, #tpu.dimension_semantics<arbitrary>, #tpu.dimension_semantics<arbitrary>], iteration_bounds = array<i64: 1, 1, 1>, scalar_prefetch = 0 : i64, scratch_operands = 1 : i64, tpu.core_type = #tpu.core_type<tc>, window_params = [{transform_indices = @transform_0, window_bounds = array<i64: 8, 8>}, {transform_indices = @transform_1, window_bounds = array<i64: 8, 5>}, {transform_indices = @transform_2, window_bounds = array<i64: 8, 4>}, {transform_indices = @transform_3, window_bounds = array<i64: 2, 8>}, {pipeline_mode = #tpu.pipeline_mode<synchronous>, transform_indices = @transform_4, window_bounds = array<i64: 4, 640>}, {pipeline_mode = #tpu.pipeline_mode<synchronous>, transform_indices = @transform_5, window_bounds = array<i64: 4, 640>}, {transform_indices = @transform_6, window_bounds = array<i64: 1, 2, 64>}]} {
    %c0_i32 = arith.constant 0 : i32
    %0 = arith.cmpi eq, %arg2, %c0_i32 : i32
    %1 = arith.extui %0 : i1 to i32
    %c0_i32_0 = arith.constant 0 : i32
    %2 = arith.cmpi ne, %1, %c0_i32_0 : i32
    scf.if %2 {
      %cst_10 = arith.constant 0.000000e+00 : f32
      %12 = vector.broadcast %cst_10 : f32 to vector<8x5xf32>
      %c0_11 = arith.constant 0 : index
      %c0_12 = arith.constant 0 : index
      %13 = vector.load %arg10[%c0_11, %c0_12] : memref<8x5xf32, #tpu.memory_space<vmem>>, vector<8x5xf32>
      tpu.vector_store %arg10[%c0_11, %c0_12], %12 {strides = array<i32>} : memref<8x5xf32, #tpu.memory_space<vmem>>, vector<8x5xf32>,
    } else {
    }
    %c0 = arith.constant 0 : index
    %c0_1 = arith.constant 0 : index
    %3 = vector.load %arg10[%c0, %c0_1] : memref<8x5xf32, #tpu.memory_space<vmem>>, vector<8x5xf32>
    %c0_2 = arith.constant 0 : index
    %c0_3 = arith.constant 0 : index
    %4 = vector.load %arg3[%c0_2, %c0_3] : memref<8x8xbf16, #tpu.memory_space<vmem>>, vector<8x8xbf16>
    %c0_4 = arith.constant 0 : index
    %c0_5 = arith.constant 0 : index
    %5 = vector.load %arg4[%c0_4, %c0_5] : memref<8x5xbf16, #tpu.memory_space<vmem>>, vector<8x5xbf16>
    %cst = arith.constant dense<0.000000e+00> : vector<8x5xf32>
    %6 = tpu.matmul %4, %5, %cst {dimension_numbers = #tpu.dot_dimension_numbers<[1], [0], [0], [1], [0, 0, 1, 1], [], []>} : vector<8x8xbf16>, vector<8x5xbf16>, vector<8x5xf32> -> vector<8x5xf32>
    %7 = arith.addf %3, %6 : vector<8x5xf32>
    %c0_6 = arith.constant 0 : index
    %c0_7 = arith.constant 0 : index
    %8 = vector.load %arg10[%c0_6, %c0_7] : memref<8x5xf32, #tpu.memory_space<vmem>>, vector<8x5xf32>
    tpu.vector_store %arg10[%c0_6, %c0_7], %7 {strides = array<i32>} : memref<8x5xf32, #tpu.memory_space<vmem>>, vector<8x5xf32>,
    %c0_i32_8 = arith.constant 0 : i32
    %9 = arith.cmpi eq, %arg2, %c0_i32_8 : i32
    %10 = arith.extui %9 : i1 to i32
    %c0_i32_9 = arith.constant 0 : i32
    %11 = arith.cmpi ne, %10, %c0_i32_9 : i32
    scf.if %11 {
      %c0_10 = arith.constant 0 : index
      %c0_11 = arith.constant 0 : index
      %12 = vector.load %arg10[%c0_10, %c0_11] : memref<8x5xf32, #tpu.memory_space<vmem>>, vector<8x5xf32>
      %13 = vector.extract_strided_slice %12 {offsets = [0, 0], sizes = [8, 4], strides = [1, 1]} : vector<8x5xf32> to vector<8x4xf32>
      %14 = vector.extract_strided_slice %12 {offsets = [0, 4], sizes = [8, 1], strides = [1, 1]} : vector<8x5xf32> to vector<8x1xf32>
      %cst_12 = arith.constant 4.000000e+00 : f32
      %15 = vector.broadcast %cst_12 : f32 to vector<8x1xf32>
      %16 = arith.minimumf %14, %15 : vector<8x1xf32>
      %17 = arith.fptosi %16 : vector<8x1xf32> to vector<8x1xi32>
      %c0_13 = arith.constant 0 : index
      %c0_14 = arith.constant 0 : index
      %18 = vector.load %arg7[%c0_13, %c0_14] : memref<4x640xf32, #tpu.memory_space<vmem>>, vector<4x640xf32>
      %cst_15 = arith.constant dense<0.000000e+00> : vector<8x640xf32>
      %19 = tpu.matmul %13, %18, %cst_15 {dimension_numbers = #tpu.dot_dimension_numbers<[1], [0], [0], [1], [0, 0, 1, 1], [], []>} : vector<8x4xf32>, vector<4x640xf32>, vector<8x640xf32> -> vector<8x640xf32>
      %c0_16 = arith.constant 0 : index
      %c0_17 = arith.constant 0 : index
      %20 = vector.load %arg5[%c0_16, %c0_17] : memref<8x4xf32, #tpu.memory_space<vmem>>, vector<8x4xf32>
      %c0_18 = arith.constant 0 : index
      %c0_19 = arith.constant 0 : index
      %21 = vector.load %arg8[%c0_18, %c0_19] : memref<4x640xf32, #tpu.memory_space<vmem>>, vector<4x640xf32>
      %cst_20 = arith.constant dense<0.000000e+00> : vector<8x640xf32>
      %22 = tpu.matmul %20, %21, %cst_20 {dimension_numbers = #tpu.dot_dimension_numbers<[1], [0], [0], [1], [0, 0, 1, 1], [], []>} : vector<8x4xf32>, vector<4x640xf32>, vector<8x640xf32> -> vector<8x640xf32>
      %23 = arith.addf %19, %22 : vector<8x640xf32>
      %24 = vector.extract_strided_slice %23 {offsets = [0, 0], sizes = [8, 64], strides = [1, 1]} : vector<8x640xf32> to vector<8x64xf32>
      %c1_i32 = arith.constant 1 : i32
      %25 = vector.broadcast %c1_i32 : i32 to vector<8x1xi32>
      %26 = arith.cmpi eq, %17, %25 : vector<8x1xi32>
      %27 = vector.extract_strided_slice %23 {offsets = [0, 128], sizes = [8, 64], strides = [1, 1]} : vector<8x640xf32> to vector<8x64xf32>
      %28 = vector.shape_cast %26 : vector<8x1xi1> to vector<8x1xi1>
      %29 = vector.broadcast %28 : vector<8x1xi1> to vector<8x64xi1>
      %30 = arith.select %29, %27, %24 : vector<8x64xi1>, vector<8x64xf32>
      %c2_i32 = arith.constant 2 : i32
      %31 = vector.broadcast %c2_i32 : i32 to vector<8x1xi32>
      %32 = arith.cmpi eq, %17, %31 : vector<8x1xi32>
      %33 = vector.extract_strided_slice %23 {offsets = [0, 256], sizes = [8, 64], strides = [1, 1]} : vector<8x640xf32> to vector<8x64xf32>
      %34 = vector.shape_cast %32 : vector<8x1xi1> to vector<8x1xi1>
      %35 = vector.broadcast %34 : vector<8x1xi1> to vector<8x64xi1>
      %36 = arith.select %35, %33, %30 : vector<8x64xi1>, vector<8x64xf32>
      %c3_i32 = arith.constant 3 : i32
      %37 = vector.broadcast %c3_i32 : i32 to vector<8x1xi32>
      %38 = arith.cmpi eq, %17, %37 : vector<8x1xi32>
      %39 = vector.extract_strided_slice %23 {offsets = [0, 384], sizes = [8, 64], strides = [1, 1]} : vector<8x640xf32> to vector<8x64xf32>
      %40 = vector.shape_cast %38 : vector<8x1xi1> to vector<8x1xi1>
      %41 = vector.broadcast %40 : vector<8x1xi1> to vector<8x64xi1>
      %42 = arith.select %41, %39, %36 : vector<8x64xi1>, vector<8x64xf32>
      %c4_i32 = arith.constant 4 : i32
      %43 = vector.broadcast %c4_i32 : i32 to vector<8x1xi32>
      %44 = arith.cmpi eq, %17, %43 : vector<8x1xi32>
      %45 = vector.extract_strided_slice %23 {offsets = [0, 512], sizes = [8, 64], strides = [1, 1]} : vector<8x640xf32> to vector<8x64xf32>
      %46 = vector.shape_cast %44 : vector<8x1xi1> to vector<8x1xi1>
      %47 = vector.broadcast %46 : vector<8x1xi1> to vector<8x64xi1>
      %48 = arith.select %47, %45, %42 : vector<8x64xi1>, vector<8x64xf32>
      %cst_21 = arith.constant 0.000000e+00 : f32
      %49 = vector.broadcast %cst_21 : f32 to vector<8x64xf32>
      %50 = arith.maximumf %48, %49 : vector<8x64xf32>
      %cst_22 = arith.constant dense<0xFF800000> : vector<8xf32>
      %51 = vector.multi_reduction <maximumf>, %50, %cst_22 [1] : vector<8x64xf32> to vector<8xf32>
      %52 = vector.shape_cast %51 : vector<8xf32> to vector<8x1xf32>
      %53 = vector.broadcast %52 : vector<8x1xf32> to vector<8x64xf32>
      %54 = arith.subf %50, %53 : vector<8x64xf32>
      %55 = math.exp %54 : vector<8x64xf32>
      %cst_23 = arith.constant dense<0.000000e+00> : vector<8xf32>
      %56 = vector.multi_reduction <add>, %55, %cst_23 [1] : vector<8x64xf32> to vector<8xf32>
      %57 = vector.shape_cast %56 : vector<8xf32> to vector<8x1xf32>
      %58 = tpu.reciprocal %57 {approx = true} : vector<8x1xf32> -> vector<8x1xf32>
      %59 = vector.broadcast %58 : vector<8x1xf32> to vector<8x64xf32>
      %60 = arith.mulf %55, %59 : vector<8x64xf32>
      %c0_24 = arith.constant 0 : index
      %c0_25 = arith.constant 0 : index
      %61 = vector.load %arg6[%c0_24, %c0_25] : memref<2x8xf32, #tpu.memory_space<vmem>>, vector<2x8xf32>
      %cst_26 = arith.constant dense<0.000000e+00> : vector<2x64xf32>
      %62 = tpu.matmul %61, %60, %cst_26 {dimension_numbers = #tpu.dot_dimension_numbers<[1], [0], [0], [1], [0, 0, 1, 1], [], []>} : vector<2x8xf32>, vector<8x64xf32>, vector<2x64xf32> -> vector<2x64xf32>
      %c0_i32_27 = arith.constant 0 : i32
      %63 = arith.cmpi eq, %arg1, %c0_i32_27 : i32
      %64 = arith.extui %63 : i1 to i32
      %c0_i32_28 = arith.constant 0 : i32
      %65 = arith.cmpi ne, %64, %c0_i32_28 : i32
      scf.if %65 {
        %cst_35 = arith.constant 0.000000e+00 : f32
        %70 = vector.broadcast %cst_35 : f32 to vector<1x2x64xf32>
        %c0_36 = arith.constant 0 : index
        %c0_37 = arith.constant 0 : index
        %c0_38 = arith.constant 0 : index
        %71 = vector.load %arg9[%c0_36, %c0_37, %c0_38] : memref<1x2x64xf32, #tpu.memory_space<vmem>>, vector<1x2x64xf32>
        tpu.vector_store %arg9[%c0_36, %c0_37, %c0_38], %70 {strides = array<i32>} : memref<1x2x64xf32, #tpu.memory_space<vmem>>, vector<1x2x64xf32>,
      } else {
      }
      %c0_29 = arith.constant 0 : index
      %c0_30 = arith.constant 0 : index
      %c0_31 = arith.constant 0 : index
      %66 = vector.load %arg9[%c0_29, %c0_30, %c0_31] : memref<1x2x64xf32, #tpu.memory_space<vmem>>, vector<1x2x64xf32>
      %67 = vector.shape_cast %62 : vector<2x64xf32> to vector<1x2x64xf32>
      %68 = arith.addf %66, %67 : vector<1x2x64xf32>
      %c0_32 = arith.constant 0 : index
      %c0_33 = arith.constant 0 : index
      %c0_34 = arith.constant 0 : index
      %69 = vector.load %arg9[%c0_32, %c0_33, %c0_34] : memref<1x2x64xf32, #tpu.memory_space<vmem>>, vector<1x2x64xf32>
      tpu.vector_store %arg9[%c0_32, %c0_33, %c0_34], %68 {strides = array<i32>} : memref<1x2x64xf32, #tpu.memory_space<vmem>>, vector<1x2x64xf32>,
    } else {
    }
    return
  }
  func.func @transform_0(%arg0: i32, %arg1: i32, %arg2: i32) -> (i32, i32) {
    %c1_i32 = arith.constant 1 : i32
    %0 = arith.muli %arg0, %c1_i32 : i32
    %1 = arith.addi %0, %arg1 : i32
    %c0_i32 = arith.constant 0 : i32
    return %1, %arg2 : i32, i32
  }
  func.func @transform_1(%arg0: i32, %arg1: i32, %arg2: i32) -> (i32, i32) {
    %c0_i32 = arith.constant 0 : i32
    %c0_i32_0 = arith.constant 0 : i32
    return %arg2, %c0_i32 : i32, i32
  }
  func.func @transform_2(%arg0: i32, %arg1: i32, %arg2: i32) -> (i32, i32) {
    %c1_i32 = arith.constant 1 : i32
    %0 = arith.muli %arg0, %c1_i32 : i32
    %1 = arith.addi %0, %arg1 : i32
    %c0_i32 = arith.constant 0 : i32
    %c0_i32_0 = arith.constant 0 : i32
    return %1, %c0_i32 : i32, i32
  }
  func.func @transform_3(%arg0: i32, %arg1: i32, %arg2: i32) -> (i32, i32) {
    %c1_i32 = arith.constant 1 : i32
    %0 = arith.muli %arg0, %c1_i32 : i32
    %1 = arith.addi %0, %arg1 : i32
    %c0_i32 = arith.constant 0 : i32
    %c0_i32_0 = arith.constant 0 : i32
    return %c0_i32, %1 : i32, i32
  }
  func.func @transform_4(%arg0: i32, %arg1: i32, %arg2: i32) -> (i32, i32) {
    %c0_i32 = arith.constant 0 : i32
    %c0_i32_0 = arith.constant 0 : i32
    %c0_i32_1 = arith.constant 0 : i32
    return %c0_i32, %c0_i32_0 : i32, i32
  }
  func.func @transform_5(%arg0: i32, %arg1: i32, %arg2: i32) -> (i32, i32) {
    %c0_i32 = arith.constant 0 : i32
    %c0_i32_0 = arith.constant 0 : i32
    %c0_i32_1 = arith.constant 0 : i32
    return %c0_i32, %c0_i32_0 : i32, i32
  }
  func.func @transform_6(%arg0: i32, %arg1: i32, %arg2: i32) -> (i32, i32, i32) {
    %c0_i32 = arith.constant 0 : i32
    %c0_i32_0 = arith.constant 0 : i32
    %c0_i32_1 = arith.constant 0 : i32
    return %arg0, %c0_i32, %c0_i32_0 : i32, i32, i32
  }
}

</mosaic_0001>

<llo_original>
// kernel: fpnn_v3_forward.1
$region0: #{fpnn_v3_forward.1}
  #allocation0 [shape = 'u32[]', space=smem, size = 0x4, offset = 0x4, fixed_abs, tag = 'smem constant byte address 0x4 - core index']
  #allocation1 [shape = 'u32[144,128]{1,0:T(1,128)}', space=vmem, size = 0x12000, scoped, tag = 'internal scratch']
  #allocation2 [shape = 'f32[8,5]{1,0:T(8,128)}', space=vmem, size = 0x1000, scoped, tag = 'scratch operand']
  %s0 = inlined_call_operand.vmem [shape: bf16[8,8], index: 0, kind: input, shape index: {}]
  %s1 = inlined_call_operand.vmem [shape: bf16[8,5], index: 1, kind: input, shape index: {}]
  %s2 = inlined_call_operand.vmem [shape: f32[8,4], index: 2, kind: input, shape index: {}]
  %s3 = inlined_call_operand.vmem [shape: f32[2,8], index: 3, kind: input, shape index: {}]
  %s4 = inlined_call_operand.vmem [shape: f32[4,640], index: 4, kind: input, shape index: {}]
  %s5 = inlined_call_operand.vmem [shape: f32[4,640], index: 5, kind: input, shape index: {}]
  %s6 = inlined_call_operand.hbm [shape: f32[1,2,64], index: 6, kind: output, shape index: {}]
  %s7 = sld [smem:[#allocation0]]
  $region46: #{fpnn_v3_forward.1} parent=0
    _
  %s9 = ssub.s32 1, %s7
  %s10 = scalar_select 0, %s9, %s7
  $region1: #{fpnn_v3_forward.1} parent=0
    #allocation3 [shape = 'u8[1024]{0}', space=vmem, size = 0x400, scoped, tag = 'output window, operand 0, single buffered']
    #allocation4 [shape = 's32[1]{0}', space=sflag, size = 0x4, scoped, tag = 'scoped memory for fpnn_v3_forward.1']
    %11 = vsyncpa [#allocation4], 0
    // Predicated region
    $region2: #{fpnn_v3_forward.1} parent=1 // pred_check
      _
    $region3: #{fpnn_v3_forward.1} parent=1 // pred_check_branch
      %13 = sbr.rel (0) target = $region5
    $region4: #{fpnn_v3_forward.1} parent=1 // pred_region
      %s14 = sadd.s32 0, 0
      %p15 = scmp.lt.s32.totalorder %s14, 0
      %s16 = scalar_select %p15, %s14, 0
      %s17 = smul.addr %s16, 4
      %s18 = scalar_lea.vmem %s0, %s17
      %s19 = sadd.s32 0, 0
    $region5: #{fpnn_v3_forward.1} parent=1 // pred_fallthru
      _
    // Predicated region
    $region6: #{fpnn_v3_forward.1} parent=1 // pred_check
      _
    $region7: #{fpnn_v3_forward.1} parent=1 // pred_check_branch
      %21 = sbr.rel (0) target = $region9
    $region8: #{fpnn_v3_forward.1} parent=1 // pred_region
      _
    $region9: #{fpnn_v3_forward.1} parent=1 // pred_fallthru
      _
    // Predicated region
    $region10: #{fpnn_v3_forward.1} parent=1 // pred_check
      _
    $region11: #{fpnn_v3_forward.1} parent=1 // pred_check_branch
      %23 = sbr.rel (0) target = $region13
    $region12: #{fpnn_v3_forward.1} parent=1 // pred_region
      %s24 = sadd.s32 0, 0
      %p25 = scmp.lt.s32.totalorder %s24, 0
      %s26 = scalar_select %p25, %s24, 0
      %s27 = smul.addr %s26, 8
      %s28 = scalar_lea.vmem %s2, %s27
      %s29 = sadd.s32 0, 0
    $region13: #{fpnn_v3_forward.1} parent=1 // pred_fallthru
      _
    // Predicated region
    $region14: #{fpnn_v3_forward.1} parent=1 // pred_check
      _
    $region15: #{fpnn_v3_forward.1} parent=1 // pred_check_branch
      %31 = sbr.rel (0) target = $region17
    $region16: #{fpnn_v3_forward.1} parent=1 // pred_region
      %s32 = sadd.s32 0, 0
      %p33 = scmp.lt.s32.totalorder %s32, 0
      %s34 = scalar_select %p33, %s32, 0
      %s35 = smul.addr %s34, 2
      %s36 = scalar_lea.vmem %s3, %s35
      %s37 = sadd.s32 0, 0
    $region17: #{fpnn_v3_forward.1} parent=1 // pred_fallthru
      _
    // Predicated region
    $region18: #{fpnn_v3_forward.1} parent=1 // pred_check
      _
    $region19: #{fpnn_v3_forward.1} parent=1 // pred_check_branch
      %39 = sbr.rel (0) target = $region21
    $region20: #{fpnn_v3_forward.1} parent=1 // pred_region
      _
    $region21: #{fpnn_v3_forward.1} parent=1 // pred_fallthru
      _
    // Predicated region
    $region22: #{fpnn_v3_forward.1} parent=1 // pred_check
      _
    $region23: #{fpnn_v3_forward.1} parent=1 // pred_check_branch
      %41 = sbr.rel (0) target = $region25
    $region24: #{fpnn_v3_forward.1} parent=1 // pred_region
      _
    $region25: #{fpnn_v3_forward.1} parent=1 // pred_fallthru
      _
    %s42 = sadd.s32 0, 0
    %p43 = scmp.lt.s32.totalorder %s42, 0
    %s44 = scalar_select %p43, %s42, 0
    %s45 = smul.addr %s44, 4
    %s46 = scalar_lea.vmem %s0, %s45
    %s47 = sadd.s32 0, 0
    %p48 = scmp.lt.s32.totalorder %s47, 0
    %s49 = scalar_select %p48, %s47, 0
    %s50 = smul.addr %s49, 8
    %s51 = scalar_lea.vmem %s2, %s50
    %s52 = sadd.s32 0, 0
    %p53 = scmp.lt.s32.totalorder %s52, 0
    %s54 = scalar_select %p53, %s52, 0
    %s55 = smul.addr %s54, 2
    %s56 = scalar_lea.vmem %s3, %s55
    %s57 = sadd.s32 0, 0
    %p58 = scmp.lt.s32.totalorder %s57, 0
    %s59 = scalar_select %p58, %s57, 0
    %s60 = smul.addr %s59, 4
    %s61 = scalar_lea.vmem %s0, %s60
    %s62 = sadd.s32 0, 0
    %s63 = sadd.s32 0, 0
    %p64 = scmp.lt.s32.totalorder %s63, 0
    %s65 = scalar_select %p64, %s63, 0
    %s66 = smul.addr %s65, 8
    %s67 = scalar_lea.vmem %s2, %s66
    %s68 = sadd.s32 0, 0
    %s69 = sadd.s32 0, 0
    %p70 = scmp.lt.s32.totalorder %s69, 0
    %s71 = scalar_select %p70, %s69, 0
    %s72 = smul.addr %s71, 2
    %s73 = scalar_lea.vmem %s3, %s72
    %s74 = sadd.s32 0, 0
    %p76 = scmp.eq.s32.totalorder 0, 0
    // Predicated region
    $region26: #{fpnn_v3_forward.1} parent=1 // pred_check
      %p77 = pneg %p76
    $region27: #{fpnn_v3_forward.1} parent=1 // pred_check_branch
      %79 = sbr.rel (%p77) target = $region29
    $region28: #{fpnn_v3_forward.1} parent=1 // pred_region
      %vm80 = vcmask 39936
      %81 = vst.msk [vmem:[#allocation2] sm:$0xff] %vm80, 0.0
    $region29: #{fpnn_v3_forward.1} parent=1 // pred_fallthru
      _
    %v82 = vld [vmem:[#allocation2] sm:$0xff]
    %v83 = vld [vmem:[%s61] sm:$0xf]
    %v84 = vld [vmem:[%s1] sm:$0xf]
    %vm85 = vcmask 64512
    %v87 = vsel %vm85, %v83, 0
    %vm89 = vcmask 1043456
    %v91 = vsel %vm89, %v84, 0
    %93 = vmatprep.subr.bf16.mxu0 0
    %94 = vmatpush1.bf16.msra.mxu0 %v91
    %95 = vmatprep.subr.bf16.mxu0 0
    %96 = vmatpush1.bf16.msra.mxu0 0
    %97 = vmatprep.subr.bf16.mxu0 0
    %98 = vmatpush1.bf16.msra.mxu0 0
    %99 = vmatprep.subr.bf16.mxu0 0
    %100 = vmatpush1.bf16.msra.mxu0 0
    %101 = vmatprep.subr.bf16.mxu0 0
    %102 = vmatpush1.bf16.msra.mxu0 0
    %103 = vmatprep.subr.bf16.mxu0 0
    %104 = vmatpush1.bf16.msra.mxu0 0
    %105 = vmatprep.subr.bf16.mxu0 0
    %106 = vmatpush1.bf16.msra.mxu0 0
    %107 = vmatprep.subr.bf16.mxu0 0
    %108 = vmatpush1.bf16.msra.mxu0 0
    %109 = vmatprep.subr.bf16.mxu0 0
    %110 = vmatpush1.bf16.msra.mxu0 0
    %111 = vmatprep.subr.bf16.mxu0 0
    %112 = vmatpush1.bf16.msra.mxu0 0
    %113 = vmatprep.subr.bf16.mxu0 0
    %114 = vmatpush1.bf16.msra.mxu0 0
    %115 = vmatprep.subr.bf16.mxu0 0
    %116 = vmatpush1.bf16.msra.mxu0 0
    %117 = vmatprep.subr.bf16.mxu0 0
    %118 = vmatpush1.bf16.msra.mxu0 0
    %119 = vmatprep.subr.bf16.mxu0 0
    %120 = vmatpush1.bf16.msra.mxu0 0
    %121 = vmatprep.subr.bf16.mxu0 0
    %122 = vmatpush1.bf16.msra.mxu0 0
    %123 = vmatprep.subr.bf16.mxu0 0
    %124 = vmatpush1.bf16.msra.mxu0 0
    %125 = vmatprep.mubr.bf16.mxu0 0
    %126 = vmatmul.mubr.bf16.gmra.mrb[0].mxu0 %v87
    %v127 = vpop.f32.mrb[0].mxu0
    %v128 = vadd.f32 0.0, %v127
    %v129 = vpop.f32.mrb[0].mxu0
    %v130 = vpop.f32.mrb[0].mxu0
    %v131 = vpop.f32.mrb[0].mxu0
    %132 = vdwg.mxu0
    %v133 = vadd.f32 %v82, %v128
    %vm134 = vcmask 39936
    %135 = vst.msk [vmem:[#allocation2] sm:$0xff] %vm134, %v133
    // Predicated region
    $region30: #{fpnn_v3_forward.1} parent=1 // pred_check
      %p136 = pneg %p76
    $region31: #{fpnn_v3_forward.1} parent=1 // pred_check_branch
      %138 = sbr.rel (%p136) target = $region33
    $region32: #{fpnn_v3_forward.1} parent=1 // pred_region
      %v139 = vld [vmem:[#allocation2] sm:$0xff]
      %v140 = vmin.f32 %v139, 4.0
      %v141 = vcvt.f32.s32.to.zero.pseudo %v140
      %v142 = vld [vmem:[%s4] sm:$0xff]
      %v143 = vld [vmem:[%s4 + $0x8] sm:$0xff]
      %v144 = vld [vmem:[%s4 + $0x10] sm:$0xf]
      %v145 = vld [vmem:[%s67] sm:$0xff]
      %v146 = vld [vmem:[%s5] sm:$0xff]
      %v147 = vld [vmem:[%s5 + $0x8] sm:$0xff]
      %v148 = vld [vmem:[%s5 + $0x10] sm:$0xf]
      %v152 = vcombine.high %v146, %v146
      %v153 = vcombine.high %v147, %v147
      %vm154 = vcmask 31744
      %v156 = vsel %vm154, %v145, 0
      %v158 = vsel %vm89, %v146, 0
      %v160 = vsel %vm89, %v152, 0
      %v162 = vsel %vm89, %v147, 0
      %v164 = vsel %vm89, %v153, 0
      %v166 = vsel %vm89, %v148, 0
      %168 = vmatprep.subr.mxu0 %v160
      %169 = vmatpush1.msra.mxu0 %v158
      %170 = vmatprep.subr.mxu0 0.0
      %171 = vmatpush1.msra.mxu0 0.0
      %172 = vmatprep.subr.mxu0 0.0
      %173 = vmatpush1.msra.mxu0 0.0
      %174 = vmatprep.subr.mxu0 0.0
      %175 = vmatpush1.msra.mxu0 0.0
      %176 = vmatprep.subr.mxu0 0.0
      %177 = vmatpush1.msra.mxu0 0.0
      %178 = vmatprep.subr.mxu0 0.0
      %179 = vmatpush1.msra.mxu0 0.0
      %180 = vmatprep.subr.mxu0 0.0
      %181 = vmatpush1.msra.mxu0 0.0
      %182 = vmatprep.subr.mxu0 0.0
      %183 = vmatpush1.msra.mxu0 0.0
      %184 = vmatprep.subr.mxu0 0.0
      %185 = vmatpush1.msra.mxu0 0.0
      %186 = vmatprep.subr.mxu0 0.0
      %187 = vmatpush1.msra.mxu0 0.0
      %188 = vmatprep.subr.mxu0 0.0
      %189 = vmatpush1.msra.mxu0 0.0
      %190 = vmatprep.subr.mxu0 0.0
      %191 = vmatpush1.msra.mxu0 0.0
      %192 = vmatprep.subr.mxu0 0.0
      %193 = vmatpush1.msra.mxu0 0.0
      %194 = vmatprep.subr.mxu0 0.0
      %195 = vmatpush1.msra.mxu0 0.0
      %196 = vmatprep.subr.mxu0 0.0
      %197 = vmatpush1.msra.mxu0 0.0
      %198 = vmatprep.subr.mxu0 0.0
      %199 = vmatpush1.msra.mxu0 0.0
      %200 = vmatprep.subr.mxu0 0.0
      %201 = vmatpush1.msra.mxu0 0.0
      %202 = vmatprep.subr.mxu0 0.0
      %203 = vmatpush1.msra.mxu0 0.0
      %204 = vmatprep.subr.mxu0 0.0
      %205 = vmatpush1.msra.mxu0 0.0
      %206 = vmatprep.subr.mxu0 0.0
      %207 = vmatpush1.msra.mxu0 0.0
      %208 = vmatprep.subr.mxu0 0.0
      %209 = vmatpush1.msra.mxu0 0.0
      %210 = vmatprep.subr.mxu0 0.0
      %211 = vmatpush1.msra.mxu0 0.0
      %212 = vmatprep.subr.mxu0 0.0
      %213 = vmatpush1.msra.mxu0 0.0
      %214 = vmatprep.subr.mxu0 0.0
      %215 = vmatpush1.msra.mxu0 0.0
      %216 = vmatprep.subr.mxu0 0.0
      %217 = vmatpush1.msra.mxu0 0.0
      %218 = vmatprep.subr.mxu0 0.0
      %219 = vmatpush1.msra.mxu0 0.0
      %220 = vmatprep.subr.mxu0 0.0
      %221 = vmatpush1.msra.mxu0 0.0
      %222 = vmatprep.subr.mxu0 0.0
      %223 = vmatpush1.msra.mxu0 0.0
      %224 = vmatprep.subr.mxu0 0.0
      %225 = vmatpush1.msra.mxu0 0.0
      %226 = vmatprep.subr.mxu0 0.0
      %227 = vmatpush1.msra.mxu0 0.0
      %228 = vmatprep.subr.mxu0 0.0
      %229 = vmatpush1.msra.mxu0 0.0
      %230 = vmatprep.subr.mxu0 0.0
      %231 = vmatpush1.msra.mxu0 0.0
      %232 = vmatprep.mubr.f32.mxu0 0.0
      %233 = vmatmul.mubr.f32.gmra.mrb[0].mxu0 %v156
      %v234 = vpop.f32.mrb[0].mxu0
      %v235 = vadd.f32 0.0, %v234
      %v236 = vpop.f32.mrb[0].mxu0
      %v237 = vadd.f32 0.0, %v236
      %238 = vdwg.mxu0
      %239 = vmatprep.subr.mxu0 %v164
      %240 = vmatpush1.msra.mxu0 %v162
      %241 = vmatprep.subr.mxu0 0.0
      %242 = vmatpush1.msra.mxu0 0.0
      %243 = vmatprep.subr.mxu0 0.0
      %244 = vmatpush1.msra.mxu0 0.0
      %245 = vmatprep.subr.mxu0 0.0
      %246 = vmatpush1.msra.mxu0 0.0
      %247 = vmatprep.subr.mxu0 0.0
      %248 = vmatpush1.msra.mxu0 0.0
      %249 = vmatprep.subr.mxu0 0.0
      %250 = vmatpush1.msra.mxu0 0.0
      %251 = vmatprep.subr.mxu0 0.0
      %252 = vmatpush1.msra.mxu0 0.0
      %253 = vmatprep.subr.mxu0 0.0
      %254 = vmatpush1.msra.mxu0 0.0
      %255 = vmatprep.subr.mxu0 0.0
      %256 = vmatpush1.msra.mxu0 0.0
      %257 = vmatprep.subr.mxu0 0.0
      %258 = vmatpush1.msra.mxu0 0.0
      %259 = vmatprep.subr.mxu0 0.0
      %260 = vmatpush1.msra.mxu0 0.0
      %261 = vmatprep.subr.mxu0 0.0
      %262 = vmatpush1.msra.mxu0 0.0
      %263 = vmatprep.subr.mxu0 0.0
      %264 = vmatpush1.msra.mxu0 0.0
      %265 = vmatprep.subr.mxu0 0.0
      %266 = vmatpush1.msra.mxu0 0.0
      %267 = vmatprep.subr.mxu0 0.0
      %268 = vmatpush1.msra.mxu0 0.0
      %269 = vmatprep.subr.mxu0 0.0
      %270 = vmatpush1.msra.mxu0 0.0
      %271 = vmatprep.subr.mxu0 0.0
      %272 = vmatpush1.msra.mxu0 0.0
      %273 = vmatprep.subr.mxu0 0.0
      %274 = vmatpush1.msra.mxu0 0.0
      %275 = vmatprep.subr.mxu0 0.0
      %276 = vmatpush1.msra.mxu0 0.0
      %277 = vmatprep.subr.mxu0 0.0
      %278 = vmatpush1.msra.mxu0 0.0
      %279 = vmatprep.subr.mxu0 0.0
      %280 = vmatpush1.msra.mxu0 0.0
      %281 = vmatprep.subr.mxu0 0.0
      %282 = vmatpush1.msra.mxu0 0.0
      %283 = vmatprep.subr.mxu0 0.0
      %284 = vmatpush1.msra.mxu0 0.0
      %285 = vmatprep.subr.mxu0 0.0
      %286 = vmatpush1.msra.mxu0 0.0
      %287 = vmatprep.subr.mxu0 0.0
      %288 = vmatpush1.msra.mxu0 0.0
      %289 = vmatprep.subr.mxu0 0.0
      %290 = vmatpush1.msra.mxu0 0.0
      %291 = vmatprep.subr.mxu0 0.0
      %292 = vmatpush1.msra.mxu0 0.0
      %293 = vmatprep.subr.mxu0 0.0
      %294 = vmatpush1.msra.mxu0 0.0
      %295 = vmatprep.subr.mxu0 0.0
      %296 = vmatpush1.msra.mxu0 0.0
      %297 = vmatprep.subr.mxu0 0.0
      %298 = vmatpush1.msra.mxu0 0.0
      %299 = vmatprep.subr.mxu0 0.0
      %300 = vmatpush1.msra.mxu0 0.0
      %301 = vmatprep.subr.mxu0 0.0
      %302 = vmatpush1.msra.mxu0 0.0
      %303 = vmatprep.mubr.f32.mxu0 0.0
      %304 = vmatmul.mubr.f32.gmra.mrb[0].mxu0 %v156
      %v305 = vpop.f32.mrb[0].mxu0
      %v306 = vadd.f32 0.0, %v305
      %v307 = vpop.f32.mrb[0].mxu0
      %v308 = vadd.f32 0.0, %v307
      %309 = vdwg.mxu0
      %310 = vmatprep.subr.mxu0 0.0
      %311 = vmatpush1.msra.mxu0 %v166
      %312 = vmatprep.subr.mxu0 0.0
      %313 = vmatpush1.msra.mxu0 0.0
      %314 = vmatprep.subr.mxu0 0.0
      %315 = vmatpush1.msra.mxu0 0.0
      %316 = vmatprep.subr.mxu0 0.0
      %317 = vmatpush1.msra.mxu0 0.0
      %318 = vmatprep.subr.mxu0 0.0
      %319 = vmatpush1.msra.mxu0 0.0
      %320 = vmatprep.subr.mxu0 0.0
      %321 = vmatpush1.msra.mxu0 0.0
      %322 = vmatprep.subr.mxu0 0.0
      %323 = vmatpush1.msra.mxu0 0.0
      %324 = vmatprep.subr.mxu0 0.0
      %325 = vmatpush1.msra.mxu0 0.0
      %326 = vmatprep.subr.mxu0 0.0
      %327 = vmatpush1.msra.mxu0 0.0
      %328 = vmatprep.subr.mxu0 0.0
      %329 = vmatpush1.msra.mxu0 0.0
      %330 = vmatprep.subr.mxu0 0.0
      %331 = vmatpush1.msra.mxu0 0.0
      %332 = vmatprep.subr.mxu0 0.0
      %333 = vmatpush1.msra.mxu0 0.0
      %334 = vmatprep.subr.mxu0 0.0
      %335 = vmatpush1.msra.mxu0 0.0
      %336 = vmatprep.subr.mxu0 0.0
      %337 = vmatpush1.msra.mxu0 0.0
      %338 = vmatprep.subr.mxu0 0.0
      %339 = vmatpush1.msra.mxu0 0.0
      %340 = vmatprep.subr.mxu0 0.0
      %341 = vmatpush1.msra.mxu0 0.0
      %342 = vmatprep.subr.mxu0 0.0
      %343 = vmatpush1.msra.mxu0 0.0
      %344 = vmatprep.subr.mxu0 0.0
      %345 = vmatpush1.msra.mxu0 0.0
      %346 = vmatprep.subr.mxu0 0.0
      %347 = vmatpush1.msra.mxu0 0.0
      %348 = vmatprep.subr.mxu0 0.0
      %349 = vmatpush1.msra.mxu0 0.0
      %350 = vmatprep.subr.mxu0 0.0
      %351 = vmatpush1.msra.mxu0 0.0
      %352 = vmatprep.subr.mxu0 0.0
      %353 = vmatpush1.msra.mxu0 0.0
      %354 = vmatprep.subr.mxu0 0.0
      %355 = vmatpush1.msra.mxu0 0.0
      %356 = vmatprep.subr.mxu0 0.0
      %357 = vmatpush1.msra.mxu0 0.0
      %358 = vmatprep.subr.mxu0 0.0
      %359 = vmatpush1.msra.mxu0 0.0
      %360 = vmatprep.subr.mxu0 0.0
      %361 = vmatpush1.msra.mxu0 0.0
      %362 = vmatprep.subr.mxu0 0.0
      %363 = vmatpush1.msra.mxu0 0.0
      %364 = vmatprep.subr.mxu0 0.0
      %365 = vmatpush1.msra.mxu0 0.0
      %366 = vmatprep.subr.mxu0 0.0
      %367 = vmatpush1.msra.mxu0 0.0
      %368 = vmatprep.subr.mxu0 0.0
      %369 = vmatpush1.msra.mxu0 0.0
      %370 = vmatprep.subr.mxu0 0.0
      %371 = vmatpush1.msra.mxu0 0.0
      %372 = vmatprep.subr.mxu0 0.0
      %373 = vmatpush1.msra.mxu0 0.0
      %374 = vmatprep.mubr.f32.mxu0 0.0
      %375 = vmatmul.mubr.f32.gmra.mrb[0].mxu0 %v156
      %v376 = vpop.f32.mrb[0].mxu0
      %v377 = vadd.f32 0.0, %v376
      %v378 = vpop.f32.mrb[0].mxu0
      %379 = vdwg.mxu0
      %v383 = vcombine.high %v142, %v142
      %v384 = vcombine.high %v143, %v143
      %v386 = vsel %vm154, %v139, 0
      %v388 = vsel %vm89, %v142, 0
      %v390 = vsel %vm89, %v383, 0
      %v392 = vsel %vm89, %v143, 0
      %v394 = vsel %vm89, %v384, 0
      %v396 = vsel %vm89, %v144, 0
      %398 = vmatprep.subr.mxu0 %v390
      %399 = vmatpush1.msra.mxu0 %v388
      %400 = vmatprep.subr.mxu0 0.0
      %401 = vmatpush1.msra.mxu0 0.0
      %402 = vmatprep.subr.mxu0 0.0
      %403 = vmatpush1.msra.mxu0 0.0
      %404 = vmatprep.subr.mxu0 0.0
      %405 = vmatpush1.msra.mxu0 0.0
      %406 = vmatprep.subr.mxu0 0.0
      %407 = vmatpush1.msra.mxu0 0.0
      %408 = vmatprep.subr.mxu0 0.0
      %409 = vmatpush1.msra.mxu0 0.0
      %410 = vmatprep.subr.mxu0 0.0
      %411 = vmatpush1.msra.mxu0 0.0
      %412 = vmatprep.subr.mxu0 0.0
      %413 = vmatpush1.msra.mxu0 0.0
      %414 = vmatprep.subr.mxu0 0.0
      %415 = vmatpush1.msra.mxu0 0.0
      %416 = vmatprep.subr.mxu0 0.0
      %417 = vmatpush1.msra.mxu0 0.0
      %418 = vmatprep.subr.mxu0 0.0
      %419 = vmatpush1.msra.mxu0 0.0
      %420 = vmatprep.subr.mxu0 0.0
      %421 = vmatpush1.msra.mxu0 0.0
      %422 = vmatprep.subr.mxu0 0.0
      %423 = vmatpush1.msra.mxu0 0.0
      %424 = vmatprep.subr.mxu0 0.0
      %425 = vmatpush1.msra.mxu0 0.0
      %426 = vmatprep.subr.mxu0 0.0
      %427 = vmatpush1.msra.mxu0 0.0
      %428 = vmatprep.subr.mxu0 0.0
      %429 = vmatpush1.msra.mxu0 0.0
      %430 = vmatprep.subr.mxu0 0.0
      %431 = vmatpush1.msra.mxu0 0.0
      %432 = vmatprep.subr.mxu0 0.0
      %433 = vmatpush1.msra.mxu0 0.0
      %434 = vmatprep.subr.mxu0 0.0
      %435 = vmatpush1.msra.mxu0 0.0
      %436 = vmatprep.subr.mxu0 0.0
      %437 = vmatpush1.msra.mxu0 0.0
      %438 = vmatprep.subr.mxu0 0.0
      %439 = vmatpush1.msra.mxu0 0.0
      %440 = vmatprep.subr.mxu0 0.0
      %441 = vmatpush1.msra.mxu0 0.0
      %442 = vmatprep.subr.mxu0 0.0
      %443 = vmatpush1.msra.mxu0 0.0
      %444 = vmatprep.subr.mxu0 0.0
      %445 = vmatpush1.msra.mxu0 0.0
      %446 = vmatprep.subr.mxu0 0.0
      %447 = vmatpush1.msra.mxu0 0.0
      %448 = vmatprep.subr.mxu0 0.0
      %449 = vmatpush1.msra.mxu0 0.0
      %450 = vmatprep.subr.mxu0 0.0
      %451 = vmatpush1.msra.mxu0 0.0
      %452 = vmatprep.subr.mxu0 0.0
      %453 = vmatpush1.msra.mxu0 0.0
      %454 = vmatprep.subr.mxu0 0.0
      %455 = vmatpush1.msra.mxu0 0.0
      %456 = vmatprep.subr.mxu0 0.0
      %457 = vmatpush1.msra.mxu0 0.0
      %458 = vmatprep.subr.mxu0 0.0
      %459 = vmatpush1.msra.mxu0 0.0
      %460 = vmatprep.subr.mxu0 0.0
      %461 = vmatpush1.msra.mxu0 0.0
      %462 = vmatprep.mubr.f32.mxu0 0.0
      %463 = vmatmul.mubr.f32.gmra.mrb[0].mxu0 %v386
      %v464 = vpop.f32.mrb[0].mxu0
      %v465 = vadd.f32 %v235, %v464
      %v466 = vpop.f32.mrb[0].mxu0
      %v467 = vadd.f32 %v237, %v466
      %468 = vdwg.mxu0
      %469 = vmatprep.subr.mxu0 %v394
      %470 = vmatpush1.msra.mxu0 %v392
      %471 = vmatprep.subr.mxu0 0.0
      %472 = vmatpush1.msra.mxu0 0.0
      %473 = vmatprep.subr.mxu0 0.0
      %474 = vmatpush1.msra.mxu0 0.0
      %475 = vmatprep.subr.mxu0 0.0
      %476 = vmatpush1.msra.mxu0 0.0
      %477 = vmatprep.subr.mxu0 0.0
      %478 = vmatpush1.msra.mxu0 0.0
      %479 = vmatprep.subr.mxu0 0.0
      %480 = vmatpush1.msra.mxu0 0.0
      %481 = vmatprep.subr.mxu0 0.0
      %482 = vmatpush1.msra.mxu0 0.0
      %483 = vmatprep.subr.mxu0 0.0
      %484 = vmatpush1.msra.mxu0 0.0
      %485 = vmatprep.subr.mxu0 0.0
      %486 = vmatpush1.msra.mxu0 0.0
      %487 = vmatprep.subr.mxu0 0.0
      %488 = vmatpush1.msra.mxu0 0.0
      %489 = vmatprep.subr.mxu0 0.0
      %490 = vmatpush1.msra.mxu0 0.0
      %491 = vmatprep.subr.mxu0 0.0
      %492 = vmatpush1.msra.mxu0 0.0
      %493 = vmatprep.subr.mxu0 0.0
      %494 = vmatpush1.msra.mxu0 0.0
      %495 = vmatprep.subr.mxu0 0.0
      %496 = vmatpush1.msra.mxu0 0.0
      %497 = vmatprep.subr.mxu0 0.0
      %498 = vmatpush1.msra.mxu0 0.0
      %499 = vmatprep.subr.mxu0 0.0
      %500 = vmatpush1.msra.mxu0 0.0
      %501 = vmatprep.subr.mxu0 0.0
      %502 = vmatpush1.msra.mxu0 0.0
      %503 = vmatprep.subr.mxu0 0.0
      %504 = vmatpush1.msra.mxu0 0.0
      %505 = vmatprep.subr.mxu0 0.0
      %506 = vmatpush1.msra.mxu0 0.0
      %507 = vmatprep.subr.mxu0 0.0
      %508 = vmatpush1.msra.mxu0 0.0
      %509 = vmatprep.subr.mxu0 0.0
      %510 = vmatpush1.msra.mxu0 0.0
      %511 = vmatprep.subr.mxu0 0.0
      %512 = vmatpush1.msra.mxu0 0.0
      %513 = vmatprep.subr.mxu0 0.0
      %514 = vmatpush1.msra.mxu0 0.0
      %515 = vmatprep.subr.mxu0 0.0
      %516 = vmatpush1.msra.mxu0 0.0
      %517 = vmatprep.subr.mxu0 0.0
      %518 = vmatpush1.msra.mxu0 0.0
      %519 = vmatprep.subr.mxu0 0.0
      %520 = vmatpush1.msra.mxu0 0.0
      %521 = vmatprep.subr.mxu0 0.0
      %522 = vmatpush1.msra.mxu0 0.0
      %523 = vmatprep.subr.mxu0 0.0
      %524 = vmatpush1.msra.mxu0 0.0
      %525 = vmatprep.subr.mxu0 0.0
      %526 = vmatpush1.msra.mxu0 0.0
      %527 = vmatprep.subr.mxu0 0.0
      %528 = vmatpush1.msra.mxu0 0.0
      %529 = vmatprep.subr.mxu0 0.0
      %530 = vmatpush1.msra.mxu0 0.0
      %531 = vmatprep.subr.mxu0 0.0
      %532 = vmatpush1.msra.mxu0 0.0
      %533 = vmatprep.mubr.f32.mxu0 0.0
      %534 = vmatmul.mubr.f32.gmra.mrb[0].mxu0 %v386
      %v535 = vpop.f32.mrb[0].mxu0
      %v536 = vadd.f32 %v306, %v535
      %v537 = vpop.f32.mrb[0].mxu0
      %v538 = vadd.f32 %v308, %v537
      %539 = vdwg.mxu0
      %540 = vmatprep.subr.mxu0 0.0
      %541 = vmatpush1.msra.mxu0 %v396
      %542 = vmatprep.subr.mxu0 0.0
      %543 = vmatpush1.msra.mxu0 0.0
      %544 = vmatprep.subr.mxu0 0.0
      %545 = vmatpush1.msra.mxu0 0.0
      %546 = vmatprep.subr.mxu0 0.0
      %547 = vmatpush1.msra.mxu0 0.0
      %548 = vmatprep.subr.mxu0 0.0
      %549 = vmatpush1.msra.mxu0 0.0
      %550 = vmatprep.subr.mxu0 0.0
      %551 = vmatpush1.msra.mxu0 0.0
      %552 = vmatprep.subr.mxu0 0.0
      %553 = vmatpush1.msra.mxu0 0.0
      %554 = vmatprep.subr.mxu0 0.0
      %555 = vmatpush1.msra.mxu0 0.0
      %556 = vmatprep.subr.mxu0 0.0
      %557 = vmatpush1.msra.mxu0 0.0
      %558 = vmatprep.subr.mxu0 0.0
      %559 = vmatpush1.msra.mxu0 0.0
      %560 = vmatprep.subr.mxu0 0.0
      %561 = vmatpush1.msra.mxu0 0.0
      %562 = vmatprep.subr.mxu0 0.0
      %563 = vmatpush1.msra.mxu0 0.0
      %564 = vmatprep.subr.mxu0 0.0
      %565 = vmatpush1.msra.mxu0 0.0
      %566 = vmatprep.subr.mxu0 0.0
      %567 = vmatpush1.msra.mxu0 0.0
      %568 = vmatprep.subr.mxu0 0.0
      %569 = vmatpush1.msra.mxu0 0.0
      %570 = vmatprep.subr.mxu0 0.0
      %571 = vmatpush1.msra.mxu0 0.0
      %572 = vmatprep.subr.mxu0 0.0
      %573 = vmatpush1.msra.mxu0 0.0
      %574 = vmatprep.subr.mxu0 0.0
      %575 = vmatpush1.msra.mxu0 0.0
      %576 = vmatprep.subr.mxu0 0.0
      %577 = vmatpush1.msra.mxu0 0.0
      %578 = vmatprep.subr.mxu0 0.0
      %579 = vmatpush1.msra.mxu0 0.0
      %580 = vmatprep.subr.mxu0 0.0
      %581 = vmatpush1.msra.mxu0 0.0
      %582 = vmatprep.subr.mxu0 0.0
      %583 = vmatpush1.msra.mxu0 0.0
      %584 = vmatprep.subr.mxu0 0.0
      %585 = vmatpush1.msra.mxu0 0.0
      %586 = vmatprep.subr.mxu0 0.0
      %587 = vmatpush1.msra.mxu0 0.0
      %588 = vmatprep.subr.mxu0 0.0
      %589 = vmatpush1.msra.mxu0 0.0
      %590 = vmatprep.subr.mxu0 0.0
      %591 = vmatpush1.msra.mxu0 0.0
      %592 = vmatprep.subr.mxu0 0.0
      %593 = vmatpush1.msra.mxu0 0.0
      %594 = vmatprep.subr.mxu0 0.0
      %595 = vmatpush1.msra.mxu0 0.0
      %596 = vmatprep.subr.mxu0 0.0
      %597 = vmatpush1.msra.mxu0 0.0
      %598 = vmatprep.subr.mxu0 0.0
      %599 = vmatpush1.msra.mxu0 0.0
      %600 = vmatprep.subr.mxu0 0.0
      %601 = vmatpush1.msra.mxu0 0.0
      %602 = vmatprep.subr.mxu0 0.0
      %603 = vmatpush1.msra.mxu0 0.0
      %604 = vmatprep.mubr.f32.mxu0 0.0
      %605 = vmatmul.mubr.f32.gmra.mrb[0].mxu0 %v386
      %v606 = vpop.f32.mrb[0].mxu0
      %v607 = vadd.f32 %v377, %v606
      %v608 = vpop.f32.mrb[0].mxu0
      %609 = vdwg.mxu0
      %vm610 = vcmp.eq.s32.totalorder %v141, 1
      %v611 = vsel %vm610, 1, 0
      %612 = vset.pattern.permute.xlu0 4
      %613 = vperm.xlu0 %612, %v611
      %v614 = vpop.permute.xlu0 %613
      %vm615 = vcmp.eq.s32.totalorder %v614, 1
      %v616 = vsel %vm615, %v467, %v465
      %vm617 = vcmp.eq.s32.totalorder %v141, 2
      %v618 = vsel %vm617, 1, 0
      %619 = vset.pattern.permute.xlu0 4
      %620 = vperm.xlu0 %619, %v618
      %v621 = vpop.permute.xlu0 %620
      %vm622 = vcmp.eq.s32.totalorder %v621, 1
      %v623 = vsel %vm622, %v536, %v616
      %vm624 = vcmp.eq.s32.totalorder %v141, 3
      %v625 = vsel %vm624, 1, 0
      %626 = vset.pattern.permute.xlu0 4
      %627 = vperm.xlu0 %626, %v625
      %v628 = vpop.permute.xlu0 %627
      %vm629 = vcmp.eq.s32.totalorder %v628, 1
      %v630 = vsel %vm629, %v538, %v623
      %vm631 = vcmp.eq.s32.totalorder %v141, 4
      %v632 = vsel %vm631, 1, 0
      %633 = vset.pattern.permute.xlu0 4
      %634 = vperm.xlu0 %633, %v632
      %v635 = vpop.permute.xlu0 %634
      %vm636 = vcmp.eq.s32.totalorder %v635, 1
      %v637 = vsel %vm636, %v607, %v630
      %v638 = vmax.f32 %v637, 0.0
      %vm639 = vcmask 523264
      %v640 = vsel %vm639, %v638, -inf
      %641 = vmax.xlane.f32.xlu0 %v640
      %v642 = vpop.xlane.xlu0 %641
      %v643 = vsub.f32 %v638, %v642
      %v644 = vmul.f32 %v643, 1.442695
      %v645 = vpow.pop %v644
      %v646 = vsel %vm639, %v645, 0.0
      %647 = vadd.xlane.f32.xlu0 %v646
      %v648 = vpop.xlane.xlu0 %647
      %v649 = vrcp.pop %v648
      %v650 = vmul.f32 %v645, %v649
      %v651 = vld [vmem:[%s73] sm:$0x3]
      %v653 = vsel %vm85, %v651, 0
      %655 = vmatprep.subr.mxu0 0.0
      %656 = vmatpush1.msra.mxu0 %v650
      %657 = vmatprep.subr.mxu0 0.0
      %658 = vmatpush1.msra.mxu0 0.0
      %659 = vmatprep.subr.mxu0 0.0
      %660 = vmatpush1.msra.mxu0 0.0
      %661 = vmatprep.subr.mxu0 0.0
      %662 = vmatpush1.msra.mxu0 0.0
      %663 = vmatprep.subr.mxu0 0.0
      %664 = vmatpush1.msra.mxu0 0.0
      %665 = vmatprep.subr.mxu0 0.0
      %666 = vmatpush1.msra.mxu0 0.0
      %667 = vmatprep.subr.mxu0 0.0
      %668 = vmatpush1.msra.mxu0 0.0
      %669 = vmatprep.subr.mxu0 0.0
      %670 = vmatpush1.msra.mxu0 0.0
      %671 = vmatprep.subr.mxu0 0.0
      %672 = vmatpush1.msra.mxu0 0.0
      %673 = vmatprep.subr.mxu0 0.0
      %674 = vmatpush1.msra.mxu0 0.0
      %675 = vmatprep.subr.mxu0 0.0
      %676 = vmatpush1.msra.mxu0 0.0
      %677 = vmatprep.subr.mxu0 0.0
      %678 = vmatpush1.msra.mxu0 0.0
      %679 = vmatprep.subr.mxu0 0.0
      %680 = vmatpush1.msra.mxu0 0.0
      %681 = vmatprep.subr.mxu0 0.0
      %682 = vmatpush1.msra.mxu0 0.0
      %683 = vmatprep.subr.mxu0 0.0
      %684 = vmatpush1.msra.mxu0 0.0
      %685 = vmatprep.subr.mxu0 0.0
      %686 = vmatpush1.msra.mxu0 0.0
      %687 = vmatprep.subr.mxu0 0.0
      %688 = vmatpush1.msra.mxu0 0.0
      %689 = vmatprep.subr.mxu0 0.0
      %690 = vmatpush1.msra.mxu0 0.0
      %691 = vmatprep.subr.mxu0 0.0
      %692 = vmatpush1.msra.mxu0 0.0
      %693 = vmatprep.subr.mxu0 0.0
      %694 = vmatpush1.msra.mxu0 0.0
      %695 = vmatprep.subr.mxu0 0.0
      %696 = vmatpush1.msra.mxu0 0.0
      %697 = vmatprep.subr.mxu0 0.0
      %698 = vmatpush1.msra.mxu0 0.0
      %699 = vmatprep.subr.mxu0 0.0
      %700 = vmatpush1.msra.mxu0 0.0
      %701 = vmatprep.subr.mxu0 0.0
      %702 = vmatpush1.msra.mxu0 0.0
      %703 = vmatprep.subr.mxu0 0.0
      %704 = vmatpush1.msra.mxu0 0.0
      %705 = vmatprep.subr.mxu0 0.0
      %706 = vmatpush1.msra.mxu0 0.0
      %707 = vmatprep.subr.mxu0 0.0
      %708 = vmatpush1.msra.mxu0 0.0
      %709 = vmatprep.subr.mxu0 0.0
      %710 = vmatpush1.msra.mxu0 0.0
      %711 = vmatprep.subr.mxu0 0.0
      %712 = vmatpush1.msra.mxu0 0.0
      %713 = vmatprep.subr.mxu0 0.0
      %714 = vmatpush1.msra.mxu0 0.0
      %715 = vmatprep.subr.mxu0 0.0
      %716 = vmatpush1.msra.mxu0 0.0
      %717 = vmatprep.subr.mxu0 0.0
      %718 = vmatpush1.msra.mxu0 0.0
      %719 = vmatprep.mubr.f32.mxu0 0.0
      %720 = vmatmul.mubr.f32.gmra.mrb[0].mxu0 %v653
      %v721 = vpop.f32.mrb[0].mxu0
      %v722 = vadd.f32 0.0, %v721
      %v723 = vpop.f32.mrb[0].mxu0
      %724 = vdwg.mxu0
      %p725 = scmp.eq.s32.totalorder 0, 0
      // Predicated region
      $region34: #{fpnn_v3_forward.1} parent=32 // pred_check
        %p726 = pneg %p725
      $region35: #{fpnn_v3_forward.1} parent=32 // pred_check_branch
        %728 = sbr.rel (%p726) target = $region37
      $region36: #{fpnn_v3_forward.1} parent=32 // pred_region
        %vm729 = vcmask 517120
        %730 = vst.msk [vmem:[#allocation3] sm:$0x3] %vm729, 0.0
      $region37: #{fpnn_v3_forward.1} parent=32 // pred_fallthru
        _
      %v731 = vld [vmem:[#allocation3] sm:$0x3]
      %v732 = vadd.f32 %v731, %v722
      %vm733 = vcmask 517120
      %734 = vst.msk [vmem:[#allocation3] sm:$0x3] %vm733, %v732
    $region33: #{fpnn_v3_forward.1} parent=1 // pred_fallthru
      _
    // Predicated region
    $region38: #{fpnn_v3_forward.1} parent=1 // pred_check
      _
    $region39: #{fpnn_v3_forward.1} parent=1 // pred_check_branch
      %736 = sbr.rel (0) target = $region41
    $region40: #{fpnn_v3_forward.1} parent=1 // pred_region
      %s738 = ssub.s32 32, 32
      %739 = vsyncadd [#allocation4], %s738
      %s741 = sshll.u32 [#allocation3], 4
      %s742 = int_to_ptr.vmem [resolvable:$true] %s741
      %744 = dma.vmem_to_hbm [thread:$0]  %s742, 32, %s6, [#allocation4]
    $region41: #{fpnn_v3_forward.1} parent=1 // pred_fallthru
      _
    // Predicated region
    $region42: #{fpnn_v3_forward.1} parent=1 // pred_check
      _
    $region43: #{fpnn_v3_forward.1} parent=1 // pred_check_branch
      %746 = sbr.rel (0) target = $region45
    $region44: #{fpnn_v3_forward.1} parent=1 // pred_region
      %747 = dma.done [#allocation4], 32
    $region45: #{fpnn_v3_forward.1} parent=1 // pred_fallthru
      _
    %748 = vsyncpa [#allocation4], 1

</llo_original>
